<compile_context>
chip_gen: v7x
topology: tpu7x:2x2x1
jax: 0.10.0
libtpu: 0.0.40
codegen_flags: <defaults>
</compile_context>

<pallas_src>
import jax
import jax.numpy as jnp
from jax import lax
from jax.experimental import pallas as pl
from jax.experimental.pallas import tpu as pltpu


def _silu(v):
    # SiLU; sigmoid goes to the EUP. Kept in f32 (v5e has no bf16 VPU/EUP).
    return v * jax.nn.sigmoid(v)


def _round_up(n, m):
    return ((n + m - 1) // m) * m


def ffnn_kernel(x_ref, stocks_ref,
                w1_ref, b1_ref,
                w2_ref, b2_ref,
                w3_ref, b3_ref,
                w4_ref, b4_ref,
                o_ref):
    T = x_ref.shape[0]
    H1 = w1_ref.shape[1]                   # 128
    tam = w2_ref.shape[0] - H1             # embedding vocabulary size

    x = x_ref[...]                         # bf16 [T, F]
    s = stocks_ref[...]                    # int32 [T, 1]

    # Cheap exact one-hot stock selector (bf16), only `tam` lanes wide.
    iota = lax.broadcasted_iota(jnp.int32, (T, tam), 1)
    onehot = (s == iota).astype(jnp.bfloat16)          # [T, tam]

    # layer 1 (MXU pass 1), f32 accumulation + f32 SiLU.
    h1 = jnp.dot(x, w1_ref[...],
                 preferred_element_type=jnp.float32) + b1_ref[...]
    a1 = _silu(h1)                                      # f32 [T, 128]

    # layer 2 (MXU pass 2) over the virtual concat [silu(h1) | onehot].
    # The embedding branch silu(emb_table) @ W2b is pre-folded into rows
    # 128.. of w2_ref, so gather + emb-SiLU + second matmul are all one pass.
    # a1 is exactly 128 lanes, so the lane-concat is vreg-aligned.
    lhs = jnp.concatenate([a1.astype(jnp.bfloat16), onehot], axis=-1)
    h2 = jnp.dot(lhs, w2_ref[...],
                 preferred_element_type=jnp.float32) + b2_ref[...]
    a2 = _silu(h2)                                      # f32 [T, 64]

    # layer 3 (MXU pass 3)
    h3 = jnp.dot(a2.astype(jnp.bfloat16), w3_ref[...],
                 preferred_element_type=jnp.float32) + b3_ref[...]
    a3 = _silu(h3)                                      # f32 [T, 32]

    # layer 4: N=1 matmul replaced by VPU multiply + lane reduction (XLU).
    h4 = jnp.sum(a3 * w4_ref[...], axis=-1, keepdims=True) + b4_ref[...]
    o_ref[...] = h4.astype(o_ref.dtype)


def prepare_params(params):
    """One-time layout/dtype prep, hoisted out of the jitted hot path.

    - Weights transposed to [in, out], biases reshaped to [1, out] f32.
    - Embedding fold (exact, done in f32): since the in-kernel gather is a
      one-hot row selection, silu(emb_table) @ W2b is precomputed to
      [tam, 64] and stacked under W2a as one [128+tam, 64] bf16 weight.
    - Matmul operands cast to bf16; accumulation stays f32 in-kernel.
    """
    w2 = params["w2"].T                                      # [128+E, 64] f32
    w2a = w2[:128, :]                                        # [128, 64]
    w2b = w2[128:, :]                                        # [E, 64]
    emb_f32 = params["emb_table"].astype(jnp.float32)        # [tam, E]
    w2b_folded = _silu(emb_f32) @ w2b                        # [tam, 64] f32
    w2_stacked = jnp.concatenate([w2a, w2b_folded],
                                 axis=0).astype(jnp.bfloat16)  # [128+tam, 64]
    return dict(
        w1=params["w1"].T.astype(jnp.bfloat16),              # [F, 128]
        b1=params["b1"][None, :].astype(jnp.float32),         # [1, 128]
        w2_stacked=w2_stacked,                                # [128+tam, 64]
        b2=params["b2"][None, :].astype(jnp.float32),         # [1, 64]
        w3=params["w3"].T.astype(jnp.bfloat16),               # [64, 32]
        b3=params["b3"][None, :].astype(jnp.float32),          # [1, 32]
        w4=params["w4"].astype(jnp.float32),                   # [1, 32] (VPU reduce row)
        b4=params["b4"][None, :].astype(jnp.float32),          # [1, 1]
    )


@jax.jit
def ffnn_forward(x, stocks, pp):
    """x: [B, n_features] f32, stocks: [B] int, pp: prepare_params() output."""
    B, F = x.shape

    # Batch tile: sublane-aligned, large enough to amortize ~0.35us/step,
    # small enough that the f32 intermediates stay well under VMEM limits
    # (even v7x's 64 MiB). Per review: DMA is not the bottleneck, don't grow.
    tile = min(1024, _round_up(B, 8))
    # v7x dual-TC: with ("parallel",) semantics the batch grid shards across
    # both TensorCores; make sure there are >= 2 grid steps when B allows.
    if tile >= 256 and _round_up(B, tile) // tile < 2:
        tile = _round_up(tile // 2, 128)
    B_pad = _round_up(B, tile)
    num_tiles = B_pad // tile
    pad = B_pad - B

    # Padded rows use stock index 0 (a valid row of the folded table) and are
    # sliced off below.
    x_p = jnp.pad(x.astype(jnp.bfloat16), ((0, pad), (0, 0)))
    s_p = jnp.pad(stocks.astype(jnp.int32), ((0, pad),)).reshape(B_pad, 1)

    weights = (pp["w1"], pp["b1"], pp["w2_stacked"], pp["b2"],
               pp["w3"], pp["b3"], pp["w4"], pp["b4"])

    in_specs = (
        [pl.BlockSpec((tile, F), lambda i: (i, 0)),    # x batch tile
         pl.BlockSpec((tile, 1), lambda i: (i, 0))]    # stocks batch tile
        + [pl.BlockSpec(w.shape, lambda i: (0, 0)) for w in weights]  # resident
    )

    out = pl.pallas_call(
        ffnn_kernel,
        out_shape=jax.ShapeDtypeStruct((B_pad, 1), jnp.float32),
        grid=(num_tiles,),
        in_specs=in_specs,
        out_specs=pl.BlockSpec((tile, 1), lambda i: (i, 0)),
        compiler_params=pltpu.CompilerParams(
            dimension_semantics=("parallel",)),
    )(x_p, s_p, *weights)
    return out[:B]


def init_params(key, n_features, tam, stock_emb_dim=20):
    """Deterministic init mimicking PyTorch defaults (uniform +/-1/sqrt(fan_in))."""
    ks = jax.random.split(key, 10)

    def lin(kw, kb, fan_in, fan_out):
        bound = 1.0 / jnp.sqrt(float(fan_in))
        w = jax.random.uniform(kw, (fan_out, fan_in), jnp.float32, -bound, bound)
        b = jax.random.uniform(kb, (fan_out,), jnp.float32, -bound, bound)
        return w, b

    w1, b1 = lin(ks[0], ks[1], n_features, 128)
    w2, b2 = lin(ks[2], ks[3], 128 + stock_emb_dim, 64)
    w3, b3 = lin(ks[4], ks[5], 64, 32)
    w4, b4 = lin(ks[6], ks[7], 32, 1)
    emb_table = jax.random.normal(ks[8], (tam, stock_emb_dim), jnp.float32)
    return dict(w1=w1, b1=b1, w2=w2, b2=b2, w3=w3, b3=b3, w4=w4, b4=b4,
                emb_table=emb_table)


def ffnn_reference_f32(x, stocks, params):
    """Exact f32 replica of the PyTorch forward (absolute sanity bound)."""
    out = x @ params["w1"].T + params["b1"]
    emb = params["emb_table"][stocks].reshape(x.shape[0], -1)
    merged = jnp.concatenate([out, emb], axis=1)
    out = _silu(merged)
    out = _silu(out @ params["w2"].T + params["b2"])
    out = _silu(out @ params["w3"].T + params["b3"])
    out = out @ params["w4"].T + params["b4"]
    return out


def ffnn_reference_mixed(x, stocks, pp):
    """Pure-JAX reference mirroring the kernel's folded bf16/f32 scheme."""
    tam = pp["w2_stacked"].shape[0] - 128
    xb = x.astype(jnp.bfloat16)
    h1 = jnp.dot(xb, pp["w1"], preferred_element_type=jnp.float32) + pp["b1"]
    a1 = _silu(h1).astype(jnp.bfloat16)
    onehot = jax.nn.one_hot(stocks, tam, dtype=jnp.bfloat16)
    lhs = jnp.concatenate([a1, onehot], axis=-1)
    h2 = jnp.dot(lhs, pp["w2_stacked"],
                 preferred_element_type=jnp.float32) + pp["b2"]
    a2 = _silu(h2)
    h3 = jnp.dot(a2.astype(jnp.bfloat16), pp["w3"],
                 preferred_element_type=jnp.float32) + pp["b3"]
    a3 = _silu(h3)
    return jnp.sum(a3 * pp["w4"], axis=-1, keepdims=True) + pp["b4"]


if __name__ == "__main__":
    n_features = 32
    tam = 10            # embedding vocabulary size
    stock_emb_dim = 20
    B = 8

    key = jax.random.PRNGKey(0)
    k_param, k_x, k_s = jax.random.split(key, 3)

    params = init_params(k_param, n_features, tam, stock_emb_dim)
    pp = prepare_params(params)   # one-time weight layout / embedding fold

    x = jax.random.normal(k_x, (B, n_features), jnp.float32)
    stocks = jax.random.randint(k_s, (B,), 0, tam, jnp.int32)

    out = jax.block_until_ready(ffnn_forward(x, stocks, pp))
    assert out.shape == (B, 1)

    # Tight check vs. a reference using the same folded bf16-operand scheme.
    ref_mixed = ffnn_reference_mixed(x, stocks, pp)
    assert jnp.allclose(out, ref_mixed, atol=2e-3, rtol=2e-3), (
        f"max abs err vs mixed ref: {jnp.max(jnp.abs(out - ref_mixed))}")

    # Loose sanity bound vs. the exact f32 PyTorch-equivalent forward
    # (nonzero only because matmul operands are bf16).
    ref_f32 = ffnn_reference_f32(x, stocks, params)
    assert float(jnp.max(jnp.abs(out - ref_f32))) < 0.1

    print("KERNEL_OK")
</pallas_src>

<mosaic_0001>
module attributes {stable_mosaic.version = 11 : i64} {
  func.func @ffnn_kernel(%arg0: i32, %arg1: memref<8x32xbf16, #tpu.memory_space<vmem>>, %arg2: memref<8x1xi32, #tpu.memory_space<vmem>>, %arg3: memref<32x128xbf16, #tpu.memory_space<vmem>>, %arg4: memref<1x128xf32, #tpu.memory_space<vmem>>, %arg5: memref<138x64xbf16, #tpu.memory_space<vmem>>, %arg6: memref<1x64xf32, #tpu.memory_space<vmem>>, %arg7: memref<64x32xbf16, #tpu.memory_space<vmem>>, %arg8: memref<1x32xf32, #tpu.memory_space<vmem>>, %arg9: memref<1x32xf32, #tpu.memory_space<vmem>>, %arg10: memref<1x1xf32, #tpu.memory_space<vmem>>, %arg11: memref<8x1xf32, #tpu.memory_space<vmem>>) attributes {dimension_semantics = [#tpu.dimension_semantics<parallel>], iteration_bounds = array<i64: 1>, scalar_prefetch = 0 : i64, scratch_operands = 0 : i64, tpu.core_type = #tpu.core_type<tc>, window_params = [{transform_indices = @transform_0, window_bounds = array<i64: 8, 32>}, {transform_indices = @transform_1, window_bounds = array<i64: 8, 1>}, {pipeline_mode = #tpu.pipeline_mode<synchronous>, transform_indices = @transform_2, window_bounds = array<i64: 32, 128>}, {pipeline_mode = #tpu.pipeline_mode<synchronous>, transform_indices = @transform_3, window_bounds = array<i64: 1, 128>}, {pipeline_mode = #tpu.pipeline_mode<synchronous>, transform_indices = @transform_4, window_bounds = array<i64: 138, 64>}, {pipeline_mode = #tpu.pipeline_mode<synchronous>, transform_indices = @transform_5, window_bounds = array<i64: 1, 64>}, {pipeline_mode = #tpu.pipeline_mode<synchronous>, transform_indices = @transform_6, window_bounds = array<i64: 64, 32>}, {pipeline_mode = #tpu.pipeline_mode<synchronous>, transform_indices = @transform_7, window_bounds = array<i64: 1, 32>}, {pipeline_mode = #tpu.pipeline_mode<synchronous>, transform_indices = @transform_8, window_bounds = array<i64: 1, 32>}, {pipeline_mode = #tpu.pipeline_mode<synchronous>, transform_indices = @transform_9, window_bounds = array<i64: 1, 1>}, {transform_indices = @transform_10, window_bounds = array<i64: 8, 1>}]} {
    %c0 = arith.constant 0 : index
    %c0_0 = arith.constant 0 : index
    %0 = vector.load %arg1[%c0, %c0_0] : memref<8x32xbf16, #tpu.memory_space<vmem>>, vector<8x32xbf16>
    %c0_1 = arith.constant 0 : index
    %c0_2 = arith.constant 0 : index
    %1 = vector.load %arg2[%c0_1, %c0_2] : memref<8x1xi32, #tpu.memory_space<vmem>>, vector<8x1xi32>
    %2 = tpu.iota {dimensions = array<i32: 1>} : vector<8x10xi32>
    %3 = vector.broadcast %1 : vector<8x1xi32> to vector<8x10xi32>
    %4 = arith.cmpi eq, %3, %2 : vector<8x10xi32>
    %5 = arith.extui %4 : vector<8x10xi1> to vector<8x10xi32>
    %6 = arith.sitofp %5 : vector<8x10xi32> to vector<8x10xf32>
    %7 = arith.truncf %6 : vector<8x10xf32> to vector<8x10xbf16>
    %c0_3 = arith.constant 0 : index
    %c0_4 = arith.constant 0 : index
    %8 = vector.load %arg3[%c0_3, %c0_4] : memref<32x128xbf16, #tpu.memory_space<vmem>>, vector<32x128xbf16>
    %cst = arith.constant dense<0.000000e+00> : vector<8x128xf32>
    %9 = tpu.matmul %0, %8, %cst {dimension_numbers = #tpu.dot_dimension_numbers<[1], [0], [0], [1], [0, 0, 1, 1], [], []>} : vector<8x32xbf16>, vector<32x128xbf16>, vector<8x128xf32> -> vector<8x128xf32>
    %c0_5 = arith.constant 0 : index
    %c0_6 = arith.constant 0 : index
    %10 = vector.load %arg4[%c0_5, %c0_6] : memref<1x128xf32, #tpu.memory_space<vmem>>, vector<1x128xf32>
    %11 = vector.broadcast %10 : vector<1x128xf32> to vector<8x128xf32>
    %12 = arith.addf %9, %11 : vector<8x128xf32>
    %13 = arith.negf %12 : vector<8x128xf32>
    %14 = math.exp %13 : vector<8x128xf32>
    %cst_7 = arith.constant 1.000000e+00 : f32
    %15 = vector.broadcast %cst_7 : f32 to vector<8x128xf32>
    %16 = arith.addf %15, %14 : vector<8x128xf32>
    %17 = arith.divf %15, %16 : vector<8x128xf32>
    %18 = arith.mulf %12, %17 : vector<8x128xf32>
    %19 = arith.truncf %18 : vector<8x128xf32> to vector<8x128xbf16>
    %20 = tpu.concatenate %19, %7 in 1 : vector<8x128xbf16>, vector<8x10xbf16> -> vector<8x138xbf16>
    %c0_8 = arith.constant 0 : index
    %c0_9 = arith.constant 0 : index
    %21 = vector.load %arg5[%c0_8, %c0_9] : memref<138x64xbf16, #tpu.memory_space<vmem>>, vector<138x64xbf16>
    %cst_10 = arith.constant dense<0.000000e+00> : vector<8x64xf32>
    %22 = tpu.matmul %20, %21, %cst_10 {dimension_numbers = #tpu.dot_dimension_numbers<[1], [0], [0], [1], [0, 0, 1, 1], [], []>} : vector<8x138xbf16>, vector<138x64xbf16>, vector<8x64xf32> -> vector<8x64xf32>
    %c0_11 = arith.constant 0 : index
    %c0_12 = arith.constant 0 : index
    %23 = vector.load %arg6[%c0_11, %c0_12] : memref<1x64xf32, #tpu.memory_space<vmem>>, vector<1x64xf32>
    %24 = vector.broadcast %23 : vector<1x64xf32> to vector<8x64xf32>
    %25 = arith.addf %22, %24 : vector<8x64xf32>
    %26 = arith.negf %25 : vector<8x64xf32>
    %27 = math.exp %26 : vector<8x64xf32>
    %cst_13 = arith.constant 1.000000e+00 : f32
    %28 = vector.broadcast %cst_13 : f32 to vector<8x64xf32>
    %29 = arith.addf %28, %27 : vector<8x64xf32>
    %30 = arith.divf %28, %29 : vector<8x64xf32>
    %31 = arith.mulf %25, %30 : vector<8x64xf32>
    %32 = arith.truncf %31 : vector<8x64xf32> to vector<8x64xbf16>
    %c0_14 = arith.constant 0 : index
    %c0_15 = arith.constant 0 : index
    %33 = vector.load %arg7[%c0_14, %c0_15] : memref<64x32xbf16, #tpu.memory_space<vmem>>, vector<64x32xbf16>
    %cst_16 = arith.constant dense<0.000000e+00> : vector<8x32xf32>
    %34 = tpu.matmul %32, %33, %cst_16 {dimension_numbers = #tpu.dot_dimension_numbers<[1], [0], [0], [1], [0, 0, 1, 1], [], []>} : vector<8x64xbf16>, vector<64x32xbf16>, vector<8x32xf32> -> vector<8x32xf32>
    %c0_17 = arith.constant 0 : index
    %c0_18 = arith.constant 0 : index
    %35 = vector.load %arg8[%c0_17, %c0_18] : memref<1x32xf32, #tpu.memory_space<vmem>>, vector<1x32xf32>
    %36 = vector.broadcast %35 : vector<1x32xf32> to vector<8x32xf32>
    %37 = arith.addf %34, %36 : vector<8x32xf32>
    %38 = arith.negf %37 : vector<8x32xf32>
    %39 = math.exp %38 : vector<8x32xf32>
    %cst_19 = arith.constant 1.000000e+00 : f32
    %40 = vector.broadcast %cst_19 : f32 to vector<8x32xf32>
    %41 = arith.addf %40, %39 : vector<8x32xf32>
    %42 = arith.divf %40, %41 : vector<8x32xf32>
    %43 = arith.mulf %37, %42 : vector<8x32xf32>
    %c0_20 = arith.constant 0 : index
    %c0_21 = arith.constant 0 : index
    %44 = vector.load %arg9[%c0_20, %c0_21] : memref<1x32xf32, #tpu.memory_space<vmem>>, vector<1x32xf32>
    %45 = vector.broadcast %44 : vector<1x32xf32> to vector<8x32xf32>
    %46 = arith.mulf %43, %45 : vector<8x32xf32>
    %cst_22 = arith.constant dense<0.000000e+00> : vector<8xf32>
    %47 = vector.multi_reduction <add>, %46, %cst_22 [1] : vector<8x32xf32> to vector<8xf32>
    %48 = vector.shape_cast %47 : vector<8xf32> to vector<8x1xf32>
    %c0_23 = arith.constant 0 : index
    %c0_24 = arith.constant 0 : index
    %49 = vector.load %arg10[%c0_23, %c0_24] : memref<1x1xf32, #tpu.memory_space<vmem>>, vector<1x1xf32>
    %50 = vector.broadcast %49 : vector<1x1xf32> to vector<8x1xf32>
    %51 = arith.addf %48, %50 : vector<8x1xf32>
    %c0_25 = arith.constant 0 : index
    %c0_26 = arith.constant 0 : index
    %52 = vector.load %arg11[%c0_25, %c0_26] : memref<8x1xf32, #tpu.memory_space<vmem>>, vector<8x1xf32>
    tpu.vector_store %arg11[%c0_25, %c0_26], %51 {strides = array<i32>} : memref<8x1xf32, #tpu.memory_space<vmem>>, vector<8x1xf32>,
    return
  }
  func.func @transform_0(%arg0: i32) -> (i32, i32) {
    %c0_i32 = arith.constant 0 : i32
    %c0_i32_0 = arith.constant 0 : i32
    return %arg0, %c0_i32 : i32, i32
  }
  func.func @transform_1(%arg0: i32) -> (i32, i32) {
    %c0_i32 = arith.constant 0 : i32
    %c0_i32_0 = arith.constant 0 : i32
    return %arg0, %c0_i32 : i32, i32
  }
  func.func @transform_2(%arg0: i32) -> (i32, i32) {
    %c0_i32 = arith.constant 0 : i32
    %c0_i32_0 = arith.constant 0 : i32
    %c0_i32_1 = arith.constant 0 : i32
    return %c0_i32, %c0_i32_0 : i32, i32
  }
  func.func @transform_3(%arg0: i32) -> (i32, i32) {
    %c0_i32 = arith.constant 0 : i32
    %c0_i32_0 = arith.constant 0 : i32
    %c0_i32_1 = arith.constant 0 : i32
    return %c0_i32, %c0_i32_0 : i32, i32
  }
  func.func @transform_4(%arg0: i32) -> (i32, i32) {
    %c0_i32 = arith.constant 0 : i32
    %c0_i32_0 = arith.constant 0 : i32
    %c0_i32_1 = arith.constant 0 : i32
    return %c0_i32, %c0_i32_0 : i32, i32
  }
  func.func @transform_5(%arg0: i32) -> (i32, i32) {
    %c0_i32 = arith.constant 0 : i32
    %c0_i32_0 = arith.constant 0 : i32
    %c0_i32_1 = arith.constant 0 : i32
    return %c0_i32, %c0_i32_0 : i32, i32
  }
  func.func @transform_6(%arg0: i32) -> (i32, i32) {
    %c0_i32 = arith.constant 0 : i32
    %c0_i32_0 = arith.constant 0 : i32
    %c0_i32_1 = arith.constant 0 : i32
    return %c0_i32, %c0_i32_0 : i32, i32
  }
  func.func @transform_7(%arg0: i32) -> (i32, i32) {
    %c0_i32 = arith.constant 0 : i32
    %c0_i32_0 = arith.constant 0 : i32
    %c0_i32_1 = arith.constant 0 : i32
    return %c0_i32, %c0_i32_0 : i32, i32
  }
  func.func @transform_8(%arg0: i32) -> (i32, i32) {
    %c0_i32 = arith.constant 0 : i32
    %c0_i32_0 = arith.constant 0 : i32
    %c0_i32_1 = arith.constant 0 : i32
    return %c0_i32, %c0_i32_0 : i32, i32
  }
  func.func @transform_9(%arg0: i32) -> (i32, i32) {
    %c0_i32 = arith.constant 0 : i32
    %c0_i32_0 = arith.constant 0 : i32
    %c0_i32_1 = arith.constant 0 : i32
    return %c0_i32, %c0_i32_0 : i32, i32
  }
  func.func @transform_10(%arg0: i32) -> (i32, i32) {
    %c0_i32 = arith.constant 0 : i32
    %c0_i32_0 = arith.constant 0 : i32
    return %arg0, %c0_i32 : i32, i32
  }
}

</mosaic_0001>

<llo_original>
// kernel: ffnn_forward.1
$region0: #{ffnn_forward.1}
  #allocation0 [shape = 'u32[]', space=smem, size = 0x4, offset = 0x4, fixed_abs, tag = 'smem constant byte address 0x4 - core index']
  #allocation1 [shape = 'u32[144,128]{1,0:T(1,128)}', space=vmem, size = 0x12000, scoped, tag = 'internal scratch']
  #allocation2 [shape = 'f32[1,1]{1,0:T(1,128)S(1)}', space=vmem, size = 0x200, scoped, tag = 'scoped memory for ffnn_forward.1']
  %s0 = inlined_call_operand.vmem [shape: bf16[8,32], index: 0, kind: input, shape index: {}]
  %s1 = inlined_call_operand.vmem [shape: s32[8,1], index: 1, kind: input, shape index: {}]
  %s2 = inlined_call_operand.vmem [shape: bf16[32,128], index: 2, kind: input, shape index: {}]
  %s3 = inlined_call_operand.vmem [shape: f32[1,128], index: 3, kind: input, shape index: {}]
  %s4 = inlined_call_operand.vmem [shape: bf16[138,64], index: 4, kind: input, shape index: {}]
  %s5 = inlined_call_operand.vmem [shape: f32[1,64], index: 5, kind: input, shape index: {}]
  %s6 = inlined_call_operand.vmem [shape: bf16[64,32], index: 6, kind: input, shape index: {}]
  %s7 = inlined_call_operand.vmem [shape: f32[1,32], index: 7, kind: input, shape index: {}]
  %s8 = inlined_call_operand.vmem [shape: f32[1,32], index: 8, kind: input, shape index: {}]
  %s9 = inlined_call_operand.<no memory space> [shape: f32[1,1], index: 9, kind: input, shape index: {}]
  %s10 = inlined_call_operand.vmem [shape: f32[8,1], index: 10, kind: output, shape index: {}]
  %s11 = sld [smem:[#allocation0]]
  $region50: #{ffnn_forward.1} parent=0
    _
  %s13 = ssub.s32 1, %s11
  %s14 = scalar_select 0, %s13, %s11
  %v15 = vstv %s9
  %16 = vst [vmem:[#allocation2] sm:$0x1] %v15
  // Predicated region
  $region2: #{ffnn_forward.1} parent=0 // pred_check
    _
  $region3: #{ffnn_forward.1} parent=0 // pred_check_branch
    %18 = sbr.rel (0) target = $region5
  $region4: #{ffnn_forward.1} parent=0 // pred_region
    _
  $region5: #{ffnn_forward.1} parent=0 // pred_fallthru
    _
  // Predicated region
  $region6: #{ffnn_forward.1} parent=0 // pred_check
    _
  $region7: #{ffnn_forward.1} parent=0 // pred_check_branch
    %20 = sbr.rel (0) target = $region9
  $region8: #{ffnn_forward.1} parent=0 // pred_region
    _
  $region9: #{ffnn_forward.1} parent=0 // pred_fallthru
    _
  // Predicated region
  $region10: #{ffnn_forward.1} parent=0 // pred_check
    _
  $region11: #{ffnn_forward.1} parent=0 // pred_check_branch
    %22 = sbr.rel (0) target = $region13
  $region12: #{ffnn_forward.1} parent=0 // pred_region
    _
  $region13: #{ffnn_forward.1} parent=0 // pred_fallthru
    _
  // Predicated region
  $region14: #{ffnn_forward.1} parent=0 // pred_check
    _
  $region15: #{ffnn_forward.1} parent=0 // pred_check_branch
    %24 = sbr.rel (0) target = $region17
  $region16: #{ffnn_forward.1} parent=0 // pred_region
    _
  $region17: #{ffnn_forward.1} parent=0 // pred_fallthru
    _
  // Predicated region
  $region18: #{ffnn_forward.1} parent=0 // pred_check
    _
  $region19: #{ffnn_forward.1} parent=0 // pred_check_branch
    %26 = sbr.rel (0) target = $region21
  $region20: #{ffnn_forward.1} parent=0 // pred_region
    _
  $region21: #{ffnn_forward.1} parent=0 // pred_fallthru
    _
  // Predicated region
  $region22: #{ffnn_forward.1} parent=0 // pred_check
    _
  $region23: #{ffnn_forward.1} parent=0 // pred_check_branch
    %28 = sbr.rel (0) target = $region25
  $region24: #{ffnn_forward.1} parent=0 // pred_region
    _
  $region25: #{ffnn_forward.1} parent=0 // pred_fallthru
    _
  // Predicated region
  $region26: #{ffnn_forward.1} parent=0 // pred_check
    _
  $region27: #{ffnn_forward.1} parent=0 // pred_check_branch
    %30 = sbr.rel (0) target = $region29
  $region28: #{ffnn_forward.1} parent=0 // pred_region
    _
  $region29: #{ffnn_forward.1} parent=0 // pred_fallthru
    _
  // Predicated region
  $region30: #{ffnn_forward.1} parent=0 // pred_check
    _
  $region31: #{ffnn_forward.1} parent=0 // pred_check_branch
    %32 = sbr.rel (0) target = $region33
  $region32: #{ffnn_forward.1} parent=0 // pred_region
    _
  $region33: #{ffnn_forward.1} parent=0 // pred_fallthru
    _
  // Predicated region
  $region34: #{ffnn_forward.1} parent=0 // pred_check
    _
  $region35: #{ffnn_forward.1} parent=0 // pred_check_branch
    %34 = sbr.rel (0) target = $region37
  $region36: #{ffnn_forward.1} parent=0 // pred_region
    _
  $region37: #{ffnn_forward.1} parent=0 // pred_fallthru
    _
  // Predicated region
  $region38: #{ffnn_forward.1} parent=0 // pred_check
    _
  $region39: #{ffnn_forward.1} parent=0 // pred_check_branch
    %36 = sbr.rel (0) target = $region41
  $region40: #{ffnn_forward.1} parent=0 // pred_region
    _
  $region41: #{ffnn_forward.1} parent=0 // pred_fallthru
    _
  %v38 = vld [vmem:[%s0] sm:$0xf]
  %v39 = vld [vmem:[%s1] sm:$0xff]
  %v40 = vlaneseq
  %v41 = vand.u32 %v40, 127
  %42 = vset.pattern.permute.xlu0 0
  %43 = vperm.xlu0 %42, %v39
  %v44 = vpop.permute.xlu0 %43
  %vm45 = vcmp.eq.s32.totalorder %v44, %v41
  %v46 = vsel %vm45, 1, 0
  %v47 = vcvt.s32.f32 %v46
  %v48 = vpack.c.bf16 %v47, %v47
  %v49 = vld [vmem:[%s2] sm:$0xf]
  %v50 = vld [vmem:[%s2 + $0x4] sm:$0xf]
  %v51 = vld [vmem:[%s2 + $0x8] sm:$0xf]
  %v52 = vld [vmem:[%s2 + $0xc] sm:$0xf]
  %v53 = vld [vmem:[%s3] sm:$0x1]
  %v55 = vlaneseq
  %v56 = vshrl.u32 %v55, 7
  %v57 = vsub.s32 0, %v56
  %v58 = vrot.slane %v53, %v57
  %v64 = vunpack.c.l.b16 %v49
  %v65 = vunpack.c.l.b16 %v50
  %v66 = vunpack.c.l.b16 %v51
  %v67 = vunpack.c.l.b16 %v52
  %v68 = vpack.c.b16 %v65, %v64
  %v69 = vpack.c.b16 %v67, %v66
  %vm72 = vcmask 261120
  %v74 = vsel %vm72, %v38, 0
  %76 = vmatprep.subr.bf16.mxu0 0
  %77 = vmatpush1.bf16.msra.mxu0 %v68
  %78 = vmatprep.subr.bf16.mxu0 0
  %79 = vmatpush1.bf16.msra.mxu0 %v69
  %80 = vmatprep.subr.bf16.mxu0 0
  %81 = vmatpush1.bf16.msra.mxu0 0
  %82 = vmatprep.subr.bf16.mxu0 0
  %83 = vmatpush1.bf16.msra.mxu0 0
  %84 = vmatprep.subr.bf16.mxu0 0
  %85 = vmatpush1.bf16.msra.mxu0 0
  %86 = vmatprep.subr.bf16.mxu0 0
  %87 = vmatpush1.bf16.msra.mxu0 0
  %88 = vmatprep.subr.bf16.mxu0 0
  %89 = vmatpush1.bf16.msra.mxu0 0
  %90 = vmatprep.subr.bf16.mxu0 0
  %91 = vmatpush1.bf16.msra.mxu0 0
  %92 = vmatprep.subr.bf16.mxu0 0
  %93 = vmatpush1.bf16.msra.mxu0 0
  %94 = vmatprep.subr.bf16.mxu0 0
  %95 = vmatpush1.bf16.msra.mxu0 0
  %96 = vmatprep.subr.bf16.mxu0 0
  %97 = vmatpush1.bf16.msra.mxu0 0
  %98 = vmatprep.subr.bf16.mxu0 0
  %99 = vmatpush1.bf16.msra.mxu0 0
  %100 = vmatprep.subr.bf16.mxu0 0
  %101 = vmatpush1.bf16.msra.mxu0 0
  %102 = vmatprep.subr.bf16.mxu0 0
  %103 = vmatpush1.bf16.msra.mxu0 0
  %104 = vmatprep.subr.bf16.mxu0 0
  %105 = vmatpush1.bf16.msra.mxu0 0
  %106 = vmatprep.subr.bf16.mxu0 0
  %107 = vmatpush1.bf16.msra.mxu0 0
  %108 = vmatprep.mubr.bf16.mxu0 0
  %109 = vmatmul.mubr.bf16.gmra.mrb[0].mxu0 %v74
  %v110 = vpop.f32.mrb[0].mxu0
  %v111 = vadd.f32 %v58, %v110
  %v112 = vpop.f32.mrb[0].mxu0
  %v113 = vpop.f32.mrb[0].mxu0
  %v114 = vpop.f32.mrb[0].mxu0
  %115 = vdwg.mxu0
  %v116 = vxor.u32 %v111, 2147483648
  %v117 = vmul.f32 %v116, 1.442695
  %v118 = vpow.pop %v117
  %v119 = vadd.f32 %v118, 1.0
  %v120 = vrcp.pop %v119
  %v121 = vmul.f32 1.0, %v120
  %v122 = vmul.f32 %v111, %v121
  %v123 = vpack.c.bf16 %v122, %v122
  %v124 = vld [vmem:[%s4] sm:$0xf]
  %v125 = vld [vmem:[%s4 + $0x4] sm:$0xf]
  %v126 = vld [vmem:[%s4 + $0x8] sm:$0xf]
  %v127 = vld [vmem:[%s4 + $0xc] sm:$0xf]
  %v128 = vld [vmem:[%s4 + $0x10] sm:$0xf]
  %v129 = vld [vmem:[%s4 + $0x14] sm:$0xf]
  %v130 = vld [vmem:[%s4 + $0x18] sm:$0xf]
  %v131 = vld [vmem:[%s4 + $0x1c] sm:$0xf]
  %v132 = vld [vmem:[%s4 + $0x20] sm:$0xf]
  %v133 = vld [vmem:[%s4 + $0x24] sm:$0xf]
  %v134 = vld [vmem:[%s4 + $0x28] sm:$0xf]
  %v135 = vld [vmem:[%s4 + $0x2c] sm:$0xf]
  %v136 = vld [vmem:[%s4 + $0x30] sm:$0xf]
  %v137 = vld [vmem:[%s4 + $0x34] sm:$0xf]
  %v138 = vld [vmem:[%s4 + $0x38] sm:$0xf]
  %v139 = vld [vmem:[%s4 + $0x3c] sm:$0xf]
  %v140 = vld [vmem:[%s4 + $0x40] sm:$0xf]
  %v141 = vld [vmem:[%s4 + $0x44] sm:$0x1]
  %v142 = vld [vmem:[%s5] sm:$0x1]
  %v144 = vlaneseq
  %v145 = vshrl.u32 %v144, 7
  %v146 = vsub.s32 0, %v145
  %v147 = vrot.slane %v142, %v146
  %v167 = vunpack.c.l.b16 %v124
  %v168 = vunpack.c.l.b16 %v125
  %v169 = vunpack.c.l.b16 %v126
  %v170 = vunpack.c.l.b16 %v127
  %v171 = vunpack.c.l.b16 %v128
  %v172 = vunpack.c.l.b16 %v129
  %v173 = vunpack.c.l.b16 %v130
  %v174 = vunpack.c.l.b16 %v131
  %v175 = vunpack.c.l.b16 %v132
  %v176 = vunpack.c.l.b16 %v133
  %v177 = vunpack.c.l.b16 %v134
  %v178 = vunpack.c.l.b16 %v135
  %v179 = vunpack.c.l.b16 %v136
  %v180 = vunpack.c.l.b16 %v137
  %v181 = vunpack.c.l.b16 %v138
  %v182 = vunpack.c.l.b16 %v139
  %v183 = vunpack.c.l.b16 %v140
  %v184 = vunpack.c.l.b16 %v141
  %v185 = vpack.c.b16 %v168, %v167
  %v186 = vpack.c.b16 %v170, %v169
  %v187 = vpack.c.b16 %v172, %v171
  %v188 = vpack.c.b16 %v174, %v173
  %v189 = vpack.c.b16 %v176, %v175
  %v190 = vpack.c.b16 %v178, %v177
  %v191 = vpack.c.b16 %v180, %v179
  %v192 = vpack.c.b16 %v182, %v181
  %v193 = vpack.c.b16 %v184, %v183
  %vm202 = vcmask 80896
  %v204 = vsel %vm202, %v48, 0
  %vm206 = vcmask 1044480
  %v208 = vsel %vm206, %v193, 0
  %210 = vmatprep.subr.bf16.mxu0 0
  %211 = vmatpush1.bf16.msra.mxu0 %v185
  %212 = vmatprep.subr.bf16.mxu0 0
  %213 = vmatpush1.bf16.msra.mxu0 %v186
  %214 = vmatprep.subr.bf16.mxu0 0
  %215 = vmatpush1.bf16.msra.mxu0 %v187
  %216 = vmatprep.subr.bf16.mxu0 0
  %217 = vmatpush1.bf16.msra.mxu0 %v188
  %218 = vmatprep.subr.bf16.mxu0 0
  %219 = vmatpush1.bf16.msra.mxu0 %v189
  %220 = vmatprep.subr.bf16.mxu0 0
  %221 = vmatpush1.bf16.msra.mxu0 %v190
  %222 = vmatprep.subr.bf16.mxu0 0
  %223 = vmatpush1.bf16.msra.mxu0 %v191
  %224 = vmatprep.subr.bf16.mxu0 0
  %225 = vmatpush1.bf16.msra.mxu0 %v192
  %226 = vmatprep.subr.bf16.mxu0 0
  %227 = vmatpush1.bf16.msra.mxu0 %v208
  %228 = vmatprep.subr.bf16.mxu0 0
  %229 = vmatpush1.bf16.msra.mxu0 0
  %230 = vmatprep.subr.bf16.mxu0 0
  %231 = vmatpush1.bf16.msra.mxu0 0
  %232 = vmatprep.subr.bf16.mxu0 0
  %233 = vmatpush1.bf16.msra.mxu0 0
  %234 = vmatprep.subr.bf16.mxu0 0
  %235 = vmatpush1.bf16.msra.mxu0 0
  %236 = vmatprep.subr.bf16.mxu0 0
  %237 = vmatpush1.bf16.msra.mxu0 0
  %238 = vmatprep.subr.bf16.mxu0 0
  %239 = vmatpush1.bf16.msra.mxu0 0
  %240 = vmatprep.subr.bf16.mxu0 0
  %241 = vmatpush1.bf16.msra.mxu0 0
  %242 = vmatprep.mubr.bf16.mxu0 %v204
  %243 = vmatmul.mubr.bf16.gmra.mrb[0].mxu0 %v123
  %v244 = vpop.f32.mrb[0].mxu0
  %v245 = vadd.f32 %v147, %v244
  %v246 = vpop.f32.mrb[0].mxu0
  %v247 = vpop.f32.mrb[0].mxu0
  %v248 = vpop.f32.mrb[0].mxu0
  %249 = vdwg.mxu0
  %v250 = vxor.u32 %v245, 2147483648
  %v251 = vmul.f32 %v250, 1.442695
  %v252 = vpow.pop %v251
  %v253 = vadd.f32 %v252, 1.0
  %v254 = vrcp.pop %v253
  %v255 = vmul.f32 1.0, %v254
  %v256 = vmul.f32 %v245, %v255
  %v257 = vpack.c.bf16 %v256, %v256
  %v258 = vld [vmem:[%s6] sm:$0xf]
  %v259 = vld [vmem:[%s6 + $0x4] sm:$0xf]
  %v260 = vld [vmem:[%s6 + $0x8] sm:$0xf]
  %v261 = vld [vmem:[%s6 + $0xc] sm:$0xf]
  %v262 = vld [vmem:[%s6 + $0x10] sm:$0xf]
  %v263 = vld [vmem:[%s6 + $0x14] sm:$0xf]
  %v264 = vld [vmem:[%s6 + $0x18] sm:$0xf]
  %v265 = vld [vmem:[%s6 + $0x1c] sm:$0xf]
  %v266 = vld [vmem:[%s7] sm:$0x1]
  %v268 = vlaneseq
  %v269 = vshrl.u32 %v268, 7
  %v270 = vsub.s32 0, %v269
  %v271 = vrot.slane %v266, %v270
  %v281 = vunpack.c.l.b16 %v258
  %v282 = vunpack.c.l.b16 %v259
  %v283 = vunpack.c.l.b16 %v260
  %v284 = vunpack.c.l.b16 %v261
  %v285 = vunpack.c.l.b16 %v262
  %v286 = vunpack.c.l.b16 %v263
  %v287 = vunpack.c.l.b16 %v264
  %v288 = vunpack.c.l.b16 %v265
  %v289 = vpack.c.b16 %v282, %v281
  %v290 = vpack.c.b16 %v284, %v283
  %v291 = vpack.c.b16 %v286, %v285
  %v292 = vpack.c.b16 %v288, %v287
  %vm297 = vcmask 523264
  %v299 = vsel %vm297, %v257, 0
  %301 = vmatprep.subr.bf16.mxu0 0
  %302 = vmatpush1.bf16.msra.mxu0 %v289
  %303 = vmatprep.subr.bf16.mxu0 0
  %304 = vmatpush1.bf16.msra.mxu0 %v290
  %305 = vmatprep.subr.bf16.mxu0 0
  %306 = vmatpush1.bf16.msra.mxu0 %v291
  %307 = vmatprep.subr.bf16.mxu0 0
  %308 = vmatpush1.bf16.msra.mxu0 %v292
  %309 = vmatprep.subr.bf16.mxu0 0
  %310 = vmatpush1.bf16.msra.mxu0 0
  %311 = vmatprep.subr.bf16.mxu0 0
  %312 = vmatpush1.bf16.msra.mxu0 0
  %313 = vmatprep.subr.bf16.mxu0 0
  %314 = vmatpush1.bf16.msra.mxu0 0
  %315 = vmatprep.subr.bf16.mxu0 0
  %316 = vmatpush1.bf16.msra.mxu0 0
  %317 = vmatprep.subr.bf16.mxu0 0
  %318 = vmatpush1.bf16.msra.mxu0 0
  %319 = vmatprep.subr.bf16.mxu0 0
  %320 = vmatpush1.bf16.msra.mxu0 0
  %321 = vmatprep.subr.bf16.mxu0 0
  %322 = vmatpush1.bf16.msra.mxu0 0
  %323 = vmatprep.subr.bf16.mxu0 0
  %324 = vmatpush1.bf16.msra.mxu0 0
  %325 = vmatprep.subr.bf16.mxu0 0
  %326 = vmatpush1.bf16.msra.mxu0 0
  %327 = vmatprep.subr.bf16.mxu0 0
  %328 = vmatpush1.bf16.msra.mxu0 0
  %329 = vmatprep.subr.bf16.mxu0 0
  %330 = vmatpush1.bf16.msra.mxu0 0
  %331 = vmatprep.subr.bf16.mxu0 0
  %332 = vmatpush1.bf16.msra.mxu0 0
  %333 = vmatprep.mubr.bf16.mxu0 0
  %334 = vmatmul.mubr.bf16.gmra.mrb[0].mxu0 %v299
  %v335 = vpop.f32.mrb[0].mxu0
  %v336 = vadd.f32 %v271, %v335
  %v337 = vpop.f32.mrb[0].mxu0
  %v338 = vpop.f32.mrb[0].mxu0
  %v339 = vpop.f32.mrb[0].mxu0
  %340 = vdwg.mxu0
  %v341 = vxor.u32 %v336, 2147483648
  %v342 = vmul.f32 %v341, 1.442695
  %v343 = vpow.pop %v342
  %v344 = vadd.f32 %v343, 1.0
  %v345 = vrcp.pop %v344
  %v346 = vmul.f32 1.0, %v345
  %v347 = vmul.f32 %v336, %v346
  %v348 = vld [vmem:[%s8] sm:$0x1]
  %v350 = vlaneseq
  %v351 = vshrl.u32 %v350, 7
  %v352 = vsub.s32 0, %v351
  %v353 = vrot.slane %v348, %v352
  %v355 = vmul.f32 %v347, %v353
  %v356 = vsel %vm72, %v355, 0.0
  %357 = vadd.xlane.f32.xlu0 %v356
  %v358 = vpop.xlane.xlu0 %357
  %v359 = vld [vmem:[#allocation2] sm:$0x1]
  %v361 = vlaneseq
  %v362 = vshrl.u32 %v361, 7
  %v363 = vsub.s32 0, %v362
  %v364 = vrot.slane %v359, %v363
  %v366 = vadd.f32 %v358, %v364
  %vm367 = vcmask 7168
  %368 = vst.msk [vmem:[%s10] sm:$0xff] %vm367, %v366
  // Predicated region
  $region42: #{ffnn_forward.1} parent=0 // pred_check
    _
  $region43: #{ffnn_forward.1} parent=0 // pred_check_branch
    %370 = sbr.rel (0) target = $region45
  $region44: #{ffnn_forward.1} parent=0 // pred_region
    _
  $region45: #{ffnn_forward.1} parent=0 // pred_fallthru
    _
  // Predicated region
  $region46: #{ffnn_forward.1} parent=0 // pred_check
    _
  $region47: #{ffnn_forward.1} parent=0 // pred_check_branch
    %372 = sbr.rel (0) target = $region49
  $region48: #{ffnn_forward.1} parent=0 // pred_region
    _
  $region49: #{ffnn_forward.1} parent=0 // pred_fallthru
    _

</llo_original>
